<compile_context>
chip_gen: v6e
topology: v6e:2x2x1
jax: 0.10.0
libtpu: 0.0.40
codegen_flags: <defaults>
</compile_context>

<pallas_src>
import jax
import jax.numpy as jnp
from jax.experimental import pallas as pl
from jax.experimental.pallas import tpu as pltpu


def conv_d318_kernel(x_ref, o_ref):
    # x_ref / o_ref: (row_tile, W).  Each row is one image row; the fixed 3x3
    # kernel collapses to out[:, j] = x[:, j] - x[:, j-1] with x[:, -1] == 0.
    x = x_ref[...]
    zero_col = jnp.zeros((x.shape[0], 1), dtype=x.dtype)
    shifted = jnp.concatenate([zero_col, x[:, :-1]], axis=1)  # x shifted right by 1 lane
    o_ref[...] = (x - shifted).astype(o_ref.dtype)


def conv_d318(x, *, target_block_bytes=2 * 1024 * 1024):
    """x: (N, 1, H, W).  Returns F.conv2d(x, fixed_kernel, padding=1) == (N, 1, H, W)."""
    N, C, H, W = x.shape
    assert C == 1, "Conv_d318 weight is (1, 1, 3, 3): input must have 1 channel"

    rows = N * C * H
    xr = x.reshape(rows, W)

    # Pick a large row tile (~target_block_bytes per block), multiple of 8 sublanes.
    itemsize = jnp.dtype(x.dtype).itemsize
    bytes_per_row = max(1, W * itemsize)
    row_tile = max(1, target_block_bytes // bytes_per_row)
    row_tile = min(row_tile, rows)
    row_tile = ((row_tile + 7) // 8) * 8          # sublane-aligned block dim

    num_blocks = pl.cdiv(rows, row_tile)
    padded_rows = num_blocks * row_tile
    if padded_rows != rows:
        # Rows are independent: zero-padded rows produce zero output, sliced off below.
        xr = jnp.pad(xr, ((0, padded_rows - rows), (0, 0)))

    out = pl.pallas_call(
        conv_d318_kernel,
        out_shape=jax.ShapeDtypeStruct((padded_rows, W), x.dtype),
        grid_spec=pltpu.PrefetchScalarGridSpec(
            num_scalar_prefetch=0,
            grid=(num_blocks,),
            in_specs=[pl.BlockSpec((row_tile, W), lambda i: (i, 0))],
            out_specs=pl.BlockSpec((row_tile, W), lambda i: (i, 0)),
        ),
        compiler_params=pltpu.CompilerParams(
            dimension_semantics=("parallel",),
            vmem_limit_bytes=32 * 1024 * 1024,
        ),
    )(xr)

    return out[:rows].reshape(N, C, H, W)


def conv_d318_ref(x):
    """Pure-JAX reference matching the PyTorch forward (cross-correlation, pad=1)."""
    shifted = jnp.pad(x, ((0, 0), (0, 0), (0, 0), (1, 0)))[..., :-1]
    return x - shifted


if __name__ == "__main__":
    # Weight is (1, 1, 3, 3) -> single input channel.
    N, C, H, W = 2, 1, 16, 16
    key = jax.random.PRNGKey(0)
    x = jax.random.normal(key, (N, C, H, W), dtype=jnp.float32)

    out = conv_d318(x)
    out = jax.block_until_ready(out)

    ref = conv_d318_ref(x)
    assert out.shape == (N, C, H, W)
    assert jnp.allclose(out, ref, atol=1e-6, rtol=1e-6), "mismatch vs reference"
    print("KERNEL_OK")
</pallas_src>

<mosaic_0001>
module attributes {stable_mosaic.version = 11 : i64} {
  func.func @conv_d318_kernel(%arg0: i32, %arg1: memref<32x16xf32, #tpu.memory_space<vmem>>, %arg2: memref<32x16xf32, #tpu.memory_space<vmem>>) attributes {dimension_semantics = [#tpu.dimension_semantics<parallel>], iteration_bounds = array<i64: 1>, scalar_prefetch = 0 : i64, scratch_operands = 0 : i64, tpu.core_type = #tpu.core_type<tc>, window_params = [{transform_indices = @transform_0, window_bounds = array<i64: 32, 16>}, {transform_indices = @transform_1, window_bounds = array<i64: 32, 16>}]} {
    %c0 = arith.constant 0 : index
    %c0_0 = arith.constant 0 : index
    %0 = vector.load %arg1[%c0, %c0_0] : memref<32x16xf32, #tpu.memory_space<vmem>>, vector<32x16xf32>
    %cst = arith.constant 0.000000e+00 : f32
    %1 = vector.broadcast %cst : f32 to vector<32x1xf32>
    %2 = vector.extract_strided_slice %0 {offsets = [0, 0], sizes = [32, 15], strides = [1, 1]} : vector<32x16xf32> to vector<32x15xf32>
    %3 = tpu.concatenate %1, %2 in 1 : vector<32x1xf32>, vector<32x15xf32> -> vector<32x16xf32>
    %4 = arith.subf %0, %3 : vector<32x16xf32>
    %c0_1 = arith.constant 0 : index
    %c0_2 = arith.constant 0 : index
    %5 = vector.load %arg2[%c0_1, %c0_2] : memref<32x16xf32, #tpu.memory_space<vmem>>, vector<32x16xf32>
    tpu.vector_store %arg2[%c0_1, %c0_2], %4 {strides = array<i32>} : memref<32x16xf32, #tpu.memory_space<vmem>>, vector<32x16xf32>,
    return
  }
  func.func @transform_0(%arg0: i32) -> (i32, i32) {
    %c0_i32 = arith.constant 0 : i32
    %c0_i32_0 = arith.constant 0 : i32
    return %arg0, %c0_i32 : i32, i32
  }
  func.func @transform_1(%arg0: i32) -> (i32, i32) {
    %c0_i32 = arith.constant 0 : i32
    %c0_i32_0 = arith.constant 0 : i32
    return %arg0, %c0_i32 : i32, i32
  }
}

</mosaic_0001>

<llo_original>
// kernel: tpu_custom_call.1
$region0: #{tpu_custom_call.1}
  #allocation0 [shape = 'u32[]', space=smem, size = 0x4, offset = 0x4, fixed_abs, tag = 'smem constant byte address 0x4 - core index']
  #allocation1 [shape = 'u32[144,128]{1,0:T(1,128)}', space=vmem, size = 0x12000, scoped, tag = 'internal scratch']
  %s0 = inlined_call_operand.vmem [shape: f32[32,16], index: 0, kind: input, shape index: {}]
  %s1 = inlined_call_operand.vmem [shape: f32[32,16], index: 1, kind: output, shape index: {}]
  %s2 = sld [smem:[#allocation0]]
  $region14: #{tpu_custom_call.1} parent=0
    _
  %s4 = ssub.s32 1, %s2
  %s5 = scalar_select 0, %s4, %s2
  // Predicated region
  $region2: #{tpu_custom_call.1} parent=0 // pred_check
    _
  $region3: #{tpu_custom_call.1} parent=0 // pred_check_branch
    %7 = sbr.rel (0) target = $region5
  $region4: #{tpu_custom_call.1} parent=0 // pred_region
    _
  $region5: #{tpu_custom_call.1} parent=0 // pred_fallthru
    _
  %v8 = vld [vmem:[%s0] sm:$0xff]
  %v9 = vld [vmem:[%s0 + $0x8] sm:$0xff]
  %v10 = vld [vmem:[%s0 + $0x10] sm:$0xff]
  %v11 = vld [vmem:[%s0 + $0x18] sm:$0xff]
  %16 = vrot.lane.b32.xlu0 %v8, 1
  %v17 = vpop.permute.xlu0 %16
  %18 = vrot.lane.b32.xlu0 %v9, 1
  %v19 = vpop.permute.xlu0 %18
  %20 = vrot.lane.b32.xlu0 %v10, 1
  %v21 = vpop.permute.xlu0 %20
  %22 = vrot.lane.b32.xlu0 %v11, 1
  %v23 = vpop.permute.xlu0 %22
  %vm28 = vcmask 7168
  %v29 = vsel %vm28, 0.0, %v17
  %v30 = vsel %vm28, 0.0, %v19
  %v31 = vsel %vm28, 0.0, %v21
  %v32 = vsel %vm28, 0.0, %v23
  %v33 = vsub.f32 %v8, %v29
  %v34 = vsub.f32 %v9, %v30
  %v35 = vsub.f32 %v10, %v31
  %v36 = vsub.f32 %v11, %v32
  %vm37 = vcmask 130048
  %38 = vst.msk [vmem:[%s1] sm:$0xff] %vm37, %v33
  %39 = vst.msk [vmem:[%s1 + $0x8] sm:$0xff] %vm37, %v34
  %40 = vst.msk [vmem:[%s1 + $0x10] sm:$0xff] %vm37, %v35
  %41 = vst.msk [vmem:[%s1 + $0x18] sm:$0xff] %vm37, %v36
  // Predicated region
  $region6: #{tpu_custom_call.1} parent=0 // pred_check
    _
  $region7: #{tpu_custom_call.1} parent=0 // pred_check_branch
    %43 = sbr.rel (0) target = $region9
  $region8: #{tpu_custom_call.1} parent=0 // pred_region
    _
  $region9: #{tpu_custom_call.1} parent=0 // pred_fallthru
    _
  // Predicated region
  $region10: #{tpu_custom_call.1} parent=0 // pred_check
    _
  $region11: #{tpu_custom_call.1} parent=0 // pred_check_branch
    %45 = sbr.rel (0) target = $region13
  $region12: #{tpu_custom_call.1} parent=0 // pred_region
    _
  $region13: #{tpu_custom_call.1} parent=0 // pred_fallthru
    _

</llo_original>
